<compile_context>
chip_gen: v7x
topology: tpu7x:2x2x1
jax: 0.10.0
libtpu: 0.0.40
codegen_flags: <defaults>
</compile_context>

<pallas_src>
import functools

import jax
import jax.numpy as jnp
from jax.experimental import pallas as pl
from jax.experimental.pallas import tpu as pltpu

_LANE = 128


def _round_up(a, m):
    return (a + m - 1) // m * m


def _residual_block_kernel(*refs, K, dilation, pad, TL, has_res_conv,
                           compute_dtype):
    """Processes one (batch, L-tile) grid point.

    refs (in order):
      x_ref  : (1, C_in_p, TL)          input tile (compute_dtype)
      w1_ref : (C_out_p, K*C_in_p)      fused conv1 weights
      b1_ref : (C_out_p, 1)             f32 bias
      w2_ref : (C_out_p, K*C_out_p)     fused conv2 weights
      b2_ref : (C_out_p, 1)             f32 bias
      [wr_ref: (C_out_p, C_in_p), br_ref: (C_out_p, 1)]   only if residual conv
      o_ref  : (1, C_out_p, TL)         output tile
      cx_ref : (C_in_p,  max(pad,1))    carry: previous tile's input tail
      ch_ref : (C_out_p, max(pad,1))    carry: previous tile's h1 tail
    """
    if has_res_conv:
        (x_ref, w1_ref, b1_ref, w2_ref, b2_ref, wr_ref, br_ref,
         o_ref, cx_ref, ch_ref) = refs
    else:
        (x_ref, w1_ref, b1_ref, w2_ref, b2_ref,
         o_ref, cx_ref, ch_ref) = refs

    l = pl.program_id(1)
    x = x_ref[0]                                   # (C_in_p, TL)

    if pad > 0:
        # Zeroing the carries at the start of each batch's sequence IS the
        # causal left zero-padding.  Scratch persists across grid steps.
        @pl.when(l == 0)
        def _():
            cx_ref[...] = jnp.zeros_like(cx_ref)
            ch_ref[...] = jnp.zeros_like(ch_ref)

    def causal_dilated_conv(inp, carry, w_ref, b_ref):
        # inp: (C, TL) compute_dtype; carry: (C, pad) previous-tile tail.
        if pad > 0:
            padded = jnp.concatenate([carry, inp], axis=1)   # (C, pad + TL)
        else:
            padded = inp
        taps = [padded[:, k * dilation:k * dilation + TL] for k in range(K)]
        slab = taps[0] if K == 1 else jnp.concatenate(taps, axis=0)
        # One fused MXU matmul with contraction K*C, f32 accumulation.
        return jnp.dot(w_ref[...], slab,
                       preferred_element_type=jnp.float32) + b_ref[...]

    # ---- causal dilated conv1 + ReLU  (dropout == identity) ----
    h1 = jnp.maximum(
        causal_dilated_conv(x, cx_ref[...] if pad > 0 else None,
                            w1_ref, b1_ref), 0.0)
    h1c = h1.astype(compute_dtype)                 # (C_out_p, TL)

    # ---- causal dilated conv2 + ReLU  (dropout == identity) ----
    h2 = jnp.maximum(
        causal_dilated_conv(h1c, ch_ref[...] if pad > 0 else None,
                            w2_ref, b2_ref), 0.0)

    # ---- residual branch ----
    if has_res_conv:
        res = jnp.dot(wr_ref[...], x,
                      preferred_element_type=jnp.float32) + br_ref[...]
    else:
        res = x.astype(jnp.float32)                # identity (C_in_p == C_out_p)

    o_ref[0] = (h2 + res).astype(o_ref.dtype)

    # Save the tails for the next tile's halo.
    if pad > 0:
        cx_ref[...] = x[:, TL - pad:]
        ch_ref[...] = h1c[:, TL - pad:]


def residual_block_forward(x, w1, b1, w2, b2, wr=None, br=None, *,
                           kernel_size, dilation,
                           compute_dtype=jnp.bfloat16, tl=512):
    """x: (B, C_in, L).  Weights in PyTorch Conv1d layout:
       w1 (C_out, C_in, K), w2 (C_out, C_out, K), wr (C_out, C_in) or None
       (None => nn.Identity residual, requires C_in == C_out)."""
    B, C_in, L = x.shape
    C_out = w1.shape[0]
    K = kernel_size
    pad = (K - 1) * dilation
    has_res_conv = wr is not None
    if not has_res_conv:
        assert C_in == C_out, "identity residual requires C_in == C_out"

    # --- padding / tiling decisions -------------------------------------
    sub = 16 if compute_dtype == jnp.bfloat16 else 8
    C_in_p = _round_up(C_in, sub)
    C_out_p = _round_up(C_out, sub)

    TL = min(tl, _round_up(L, _LANE))
    TL = max(TL, _round_up(max(pad, 1), _LANE))    # carry needs TL >= pad
    L_p = _round_up(L, TL)
    n_l = L_p // TL

    # --- operand prep (plain JAX glue) ----------------------------------
    xp = jnp.pad(x, ((0, 0), (0, C_in_p - C_in), (0, L_p - L))
                 ).astype(compute_dtype)

    def fuse_w(w, cin, cin_p):
        # (C_out, cin, K) -> zero-pad -> (C_out_p, K*cin_p), col = k*cin_p + c
        wp = jnp.pad(w, ((0, C_out_p - C_out), (0, cin_p - cin), (0, 0)))
        return jnp.transpose(wp, (0, 2, 1)).reshape(C_out_p, K * cin_p
                                                    ).astype(compute_dtype)

    def pad_b(b):
        return jnp.pad(b, (0, C_out_p - C_out)).reshape(C_out_p, 1
                                                        ).astype(jnp.float32)

    w1_f, w2_f = fuse_w(w1, C_in, C_in_p), fuse_w(w2, C_out, C_out_p)
    b1_c, b2_c = pad_b(b1), pad_b(b2)

    args = [xp, w1_f, b1_c, w2_f, b2_c]
    in_specs = [
        pl.BlockSpec((1, C_in_p, TL), lambda b, l: (b, 0, l)),
        pl.BlockSpec((C_out_p, K * C_in_p), lambda b, l: (0, 0)),
        pl.BlockSpec((C_out_p, 1), lambda b, l: (0, 0)),
        pl.BlockSpec((C_out_p, K * C_out_p), lambda b, l: (0, 0)),
        pl.BlockSpec((C_out_p, 1), lambda b, l: (0, 0)),
    ]
    if has_res_conv:
        wr_p = jnp.pad(wr, ((0, C_out_p - C_out), (0, C_in_p - C_in))
                       ).astype(compute_dtype)
        args += [wr_p, pad_b(br)]
        in_specs += [
            pl.BlockSpec((C_out_p, C_in_p), lambda b, l: (0, 0)),
            pl.BlockSpec((C_out_p, 1), lambda b, l: (0, 0)),
        ]

    kernel = functools.partial(
        _residual_block_kernel,
        K=K, dilation=dilation, pad=pad, TL=TL,
        has_res_conv=has_res_conv, compute_dtype=compute_dtype)

    # --- scoped-VMEM budget: only raise the limit when the tile needs it ---
    dsz = jnp.dtype(compute_dtype).itemsize
    est = (2 * (C_in_p * TL * dsz + C_out_p * TL * 4)            # in/out blocks (dbl-buf)
           + 2 * (C_out_p * K * (C_in_p + C_out_p) + C_out_p * C_in_p) * dsz
           + 2 * (C_in_p + C_out_p) * max(pad, 1) * dsz          # carries
           + 6 * C_out_p * TL * 4)                               # f32 temps headroom
    vmem_limit = (min(2 * est, 48 * 1024 * 1024)
                  if est > 8 * 1024 * 1024 else None)

    out = pl.pallas_call(
        kernel,
        out_shape=jax.ShapeDtypeStruct((B, C_out_p, L_p), x.dtype),
        grid_spec=pltpu.PrefetchScalarGridSpec(
            num_scalar_prefetch=0,
            grid=(B, n_l),
            in_specs=in_specs,
            out_specs=pl.BlockSpec((1, C_out_p, TL), lambda b, l: (b, 0, l)),
            scratch_shapes=[
                pltpu.VMEM((C_in_p, max(pad, 1)), compute_dtype),
                pltpu.VMEM((C_out_p, max(pad, 1)), compute_dtype),
            ],
        ),
        compiler_params=pltpu.CompilerParams(
            dimension_semantics=("parallel", "arbitrary"),
            vmem_limit_bytes=vmem_limit),
    )(*args)

    return out[:, :C_out, :L]


def residual_block_reference(x, w1, b1, w2, b2, wr=None, br=None, *,
                             kernel_size, dilation):
    """Pure-JAX reference of the PyTorch forward (dropout = identity)."""
    pad = (kernel_size - 1) * dilation
    L = x.shape[-1]

    def causal_conv(inp, w, b):
        xp = jnp.pad(inp, ((0, 0), (0, 0), (pad, 0)))
        out = b[None, :, None]
        for k in range(kernel_size):
            off = k * dilation
            out = out + jnp.einsum('oc,bcl->bol', w[:, :, k],
                                   xp[:, :, off:off + L])
        return out

    if wr is not None:
        res = jnp.einsum('oc,bcl->bol', wr, x) + br[None, :, None]
    else:
        res = x
    h = jax.nn.relu(causal_conv(x, w1, b1))
    h = jax.nn.relu(causal_conv(h, w2, b2))
    return h + res


if __name__ == "__main__":
    key = jax.random.PRNGKey(0)

    # ---- Test A/B: C_in != C_out (conv residual), multi L-tile (carry) ----
    B, C_in, C_out, L, K, d = 2, 4, 8, 300, 3, 2
    k_x, k_w1, k_b1, k_w2, k_b2, k_wr, k_br = jax.random.split(key, 7)
    x = jax.random.normal(k_x, (B, C_in, L), dtype=jnp.float32)
    w1 = jax.random.normal(k_w1, (C_out, C_in, K), dtype=jnp.float32) * 0.3
    b1 = jax.random.normal(k_b1, (C_out,), dtype=jnp.float32) * 0.1
    w2 = jax.random.normal(k_w2, (C_out, C_out, K), dtype=jnp.float32) * 0.3
    b2 = jax.random.normal(k_b2, (C_out,), dtype=jnp.float32) * 0.1
    wr = jax.random.normal(k_wr, (C_out, C_in), dtype=jnp.float32) * 0.3
    br = jax.random.normal(k_br, (C_out,), dtype=jnp.float32) * 0.1

    ref = residual_block_reference(x, w1, b1, w2, b2, wr, br,
                                   kernel_size=K, dilation=d)

    # A: f32 compute path, exact structure check (3 L-tiles of 128).
    out_f32 = residual_block_forward(x, w1, b1, w2, b2, wr, br,
                                     kernel_size=K, dilation=d,
                                     compute_dtype=jnp.float32, tl=128)
    out_f32 = jax.block_until_ready(out_f32)
    assert out_f32.shape == (B, C_out, L)
    assert jnp.allclose(out_f32, ref, atol=1e-4, rtol=1e-4), "f32 mismatch"

    # B: bf16 MXU path (f32 accumulation), loose tolerance.
    out_bf16 = residual_block_forward(x, w1, b1, w2, b2, wr, br,
                                      kernel_size=K, dilation=d,
                                      compute_dtype=jnp.bfloat16, tl=128)
    out_bf16 = jax.block_until_ready(out_bf16)
    assert out_bf16.shape == (B, C_out, L)
    assert jnp.allclose(out_bf16, ref, atol=0.15, rtol=0.05), "bf16 mismatch"

    # ---- Test C: identity residual (C_in == C_out), different K/dilation ----
    C, L2, K2, d2 = 8, 160, 2, 4
    k_x2, k_w1b, k_b1b, k_w2b, k_b2b = jax.random.split(jax.random.PRNGKey(1), 5)
    x2 = jax.random.normal(k_x2, (B, C, L2), dtype=jnp.float32)
    w1b = jax.random.normal(k_w1b, (C, C, K2), dtype=jnp.float32) * 0.3
    b1b = jax.random.normal(k_b1b, (C,), dtype=jnp.float32) * 0.1
    w2b = jax.random.normal(k_w2b, (C, C, K2), dtype=jnp.float32) * 0.3
    b2b = jax.random.normal(k_b2b, (C,), dtype=jnp.float32) * 0.1

    ref2 = residual_block_reference(x2, w1b, b1b, w2b, b2b, None, None,
                                    kernel_size=K2, dilation=d2)
    out2 = residual_block_forward(x2, w1b, b1b, w2b, b2b, None, None,
                                  kernel_size=K2, dilation=d2,
                                  compute_dtype=jnp.float32, tl=128)
    out2 = jax.block_until_ready(out2)
    assert out2.shape == (B, C, L2)
    assert jnp.allclose(out2, ref2, atol=1e-4, rtol=1e-4), "identity mismatch"

    print("KERNEL_OK")
</pallas_src>

<mosaic_0001>
module attributes {stable_mosaic.version = 11 : i64} {
  func.func @_residual_block_kernel(%arg0: i32, %arg1: i32, %arg2: memref<1x8x128xf32, #tpu.memory_space<vmem>>, %arg3: memref<8x24xf32, #tpu.memory_space<vmem>>, %arg4: memref<8x1xf32, #tpu.memory_space<vmem>>, %arg5: memref<8x24xf32, #tpu.memory_space<vmem>>, %arg6: memref<8x1xf32, #tpu.memory_space<vmem>>, %arg7: memref<8x8xf32, #tpu.memory_space<vmem>>, %arg8: memref<8x1xf32, #tpu.memory_space<vmem>>, %arg9: memref<1x8x128xf32, #tpu.memory_space<vmem>>, %arg10: memref<8x4xf32, #tpu.memory_space<vmem>>, %arg11: memref<8x4xf32, #tpu.memory_space<vmem>>) attributes {dimension_semantics = [#tpu.dimension_semantics<parallel>, #tpu.dimension_semantics<arbitrary>], iteration_bounds = array<i64: 2, 3>, scalar_prefetch = 0 : i64, scratch_operands = 2 : i64, tpu.core_type = #tpu.core_type<tc>, window_params = [{transform_indices = @transform_0, window_bounds = array<i64: 1, 8, 128>}, {pipeline_mode = #tpu.pipeline_mode<synchronous>, transform_indices = @transform_1, window_bounds = array<i64: 8, 24>}, {pipeline_mode = #tpu.pipeline_mode<synchronous>, transform_indices = @transform_2, window_bounds = array<i64: 8, 1>}, {pipeline_mode = #tpu.pipeline_mode<synchronous>, transform_indices = @transform_3, window_bounds = array<i64: 8, 24>}, {pipeline_mode = #tpu.pipeline_mode<synchronous>, transform_indices = @transform_4, window_bounds = array<i64: 8, 1>}, {pipeline_mode = #tpu.pipeline_mode<synchronous>, transform_indices = @transform_5, window_bounds = array<i64: 8, 8>}, {pipeline_mode = #tpu.pipeline_mode<synchronous>, transform_indices = @transform_6, window_bounds = array<i64: 8, 1>}, {transform_indices = @transform_7, window_bounds = array<i64: 1, 8, 128>}]} {
    %c0 = arith.constant 0 : index
    %c0_0 = arith.constant 0 : index
    %c0_1 = arith.constant 0 : index
    %0 = vector.load %arg2[%c0, %c0_0, %c0_1] : memref<1x8x128xf32, #tpu.memory_space<vmem>>, vector<1x8x128xf32>
    %1 = vector.shape_cast %0 : vector<1x8x128xf32> to vector<8x128xf32>
    %c0_i32 = arith.constant 0 : i32
    %2 = arith.cmpi eq, %arg1, %c0_i32 : i32
    %3 = arith.extui %2 : i1 to i32
    %c0_i32_2 = arith.constant 0 : i32
    %4 = arith.cmpi ne, %3, %c0_i32_2 : i32
    scf.if %4 {
      %cst_30 = arith.constant 0.000000e+00 : f32
      %44 = vector.broadcast %cst_30 : f32 to vector<8x4xf32>
      %c0_31 = arith.constant 0 : index
      %c0_32 = arith.constant 0 : index
      %45 = vector.load %arg10[%c0_31, %c0_32] : memref<8x4xf32, #tpu.memory_space<vmem>>, vector<8x4xf32>
      tpu.vector_store %arg10[%c0_31, %c0_32], %44 {strides = array<i32>} : memref<8x4xf32, #tpu.memory_space<vmem>>, vector<8x4xf32>,
      %cst_33 = arith.constant 0.000000e+00 : f32
      %46 = vector.broadcast %cst_33 : f32 to vector<8x4xf32>
      %c0_34 = arith.constant 0 : index
      %c0_35 = arith.constant 0 : index
      %47 = vector.load %arg11[%c0_34, %c0_35] : memref<8x4xf32, #tpu.memory_space<vmem>>, vector<8x4xf32>
      tpu.vector_store %arg11[%c0_34, %c0_35], %46 {strides = array<i32>} : memref<8x4xf32, #tpu.memory_space<vmem>>, vector<8x4xf32>,
    } else {
    }
    %c0_3 = arith.constant 0 : index
    %c0_4 = arith.constant 0 : index
    %5 = vector.load %arg10[%c0_3, %c0_4] : memref<8x4xf32, #tpu.memory_space<vmem>>, vector<8x4xf32>
    %6 = tpu.concatenate %5, %1 in 1 : vector<8x4xf32>, vector<8x128xf32> -> vector<8x132xf32>
    %7 = vector.extract_strided_slice %6 {offsets = [0, 0], sizes = [8, 128], strides = [1, 1]} : vector<8x132xf32> to vector<8x128xf32>
    %8 = vector.extract_strided_slice %6 {offsets = [0, 2], sizes = [8, 128], strides = [1, 1]} : vector<8x132xf32> to vector<8x128xf32>
    %9 = vector.extract_strided_slice %6 {offsets = [0, 4], sizes = [8, 128], strides = [1, 1]} : vector<8x132xf32> to vector<8x128xf32>
    %10 = tpu.concatenate %7, %8, %9 in 0 : vector<8x128xf32>, vector<8x128xf32>, vector<8x128xf32> -> vector<24x128xf32>
    %c0_5 = arith.constant 0 : index
    %c0_6 = arith.constant 0 : index
    %11 = vector.load %arg3[%c0_5, %c0_6] : memref<8x24xf32, #tpu.memory_space<vmem>>, vector<8x24xf32>
    %cst = arith.constant dense<0.000000e+00> : vector<8x128xf32>
    %12 = tpu.matmul %11, %10, %cst {dimension_numbers = #tpu.dot_dimension_numbers<[1], [0], [0], [1], [0, 0, 1, 1], [], []>} : vector<8x24xf32>, vector<24x128xf32>, vector<8x128xf32> -> vector<8x128xf32>
    %c0_7 = arith.constant 0 : index
    %c0_8 = arith.constant 0 : index
    %13 = vector.load %arg4[%c0_7, %c0_8] : memref<8x1xf32, #tpu.memory_space<vmem>>, vector<8x1xf32>
    %14 = vector.broadcast %13 : vector<8x1xf32> to vector<8x128xf32>
    %15 = arith.addf %12, %14 : vector<8x128xf32>
    %cst_9 = arith.constant 0.000000e+00 : f32
    %16 = vector.broadcast %cst_9 : f32 to vector<8x128xf32>
    %17 = arith.maximumf %15, %16 : vector<8x128xf32>
    %c0_10 = arith.constant 0 : index
    %c0_11 = arith.constant 0 : index
    %18 = vector.load %arg11[%c0_10, %c0_11] : memref<8x4xf32, #tpu.memory_space<vmem>>, vector<8x4xf32>
    %19 = tpu.concatenate %18, %17 in 1 : vector<8x4xf32>, vector<8x128xf32> -> vector<8x132xf32>
    %20 = vector.extract_strided_slice %19 {offsets = [0, 0], sizes = [8, 128], strides = [1, 1]} : vector<8x132xf32> to vector<8x128xf32>
    %21 = vector.extract_strided_slice %19 {offsets = [0, 2], sizes = [8, 128], strides = [1, 1]} : vector<8x132xf32> to vector<8x128xf32>
    %22 = vector.extract_strided_slice %19 {offsets = [0, 4], sizes = [8, 128], strides = [1, 1]} : vector<8x132xf32> to vector<8x128xf32>
    %23 = tpu.concatenate %20, %21, %22 in 0 : vector<8x128xf32>, vector<8x128xf32>, vector<8x128xf32> -> vector<24x128xf32>
    %c0_12 = arith.constant 0 : index
    %c0_13 = arith.constant 0 : index
    %24 = vector.load %arg5[%c0_12, %c0_13] : memref<8x24xf32, #tpu.memory_space<vmem>>, vector<8x24xf32>
    %cst_14 = arith.constant dense<0.000000e+00> : vector<8x128xf32>
    %25 = tpu.matmul %24, %23, %cst_14 {dimension_numbers = #tpu.dot_dimension_numbers<[1], [0], [0], [1], [0, 0, 1, 1], [], []>} : vector<8x24xf32>, vector<24x128xf32>, vector<8x128xf32> -> vector<8x128xf32>
    %c0_15 = arith.constant 0 : index
    %c0_16 = arith.constant 0 : index
    %26 = vector.load %arg6[%c0_15, %c0_16] : memref<8x1xf32, #tpu.memory_space<vmem>>, vector<8x1xf32>
    %27 = vector.broadcast %26 : vector<8x1xf32> to vector<8x128xf32>
    %28 = arith.addf %25, %27 : vector<8x128xf32>
    %cst_17 = arith.constant 0.000000e+00 : f32
    %29 = vector.broadcast %cst_17 : f32 to vector<8x128xf32>
    %30 = arith.maximumf %28, %29 : vector<8x128xf32>
    %c0_18 = arith.constant 0 : index
    %c0_19 = arith.constant 0 : index
    %31 = vector.load %arg7[%c0_18, %c0_19] : memref<8x8xf32, #tpu.memory_space<vmem>>, vector<8x8xf32>
    %cst_20 = arith.constant dense<0.000000e+00> : vector<8x128xf32>
    %32 = tpu.matmul %31, %1, %cst_20 {dimension_numbers = #tpu.dot_dimension_numbers<[1], [0], [0], [1], [0, 0, 1, 1], [], []>} : vector<8x8xf32>, vector<8x128xf32>, vector<8x128xf32> -> vector<8x128xf32>
    %c0_21 = arith.constant 0 : index
    %c0_22 = arith.constant 0 : index
    %33 = vector.load %arg8[%c0_21, %c0_22] : memref<8x1xf32, #tpu.memory_space<vmem>>, vector<8x1xf32>
    %34 = vector.broadcast %33 : vector<8x1xf32> to vector<8x128xf32>
    %35 = arith.addf %32, %34 : vector<8x128xf32>
    %36 = arith.addf %30, %35 : vector<8x128xf32>
    %c0_23 = arith.constant 0 : index
    %c0_24 = arith.constant 0 : index
    %c0_25 = arith.constant 0 : index
    %37 = vector.load %arg9[%c0_23, %c0_24, %c0_25] : memref<1x8x128xf32, #tpu.memory_space<vmem>>, vector<1x8x128xf32>
    %38 = vector.shape_cast %37 : vector<1x8x128xf32> to vector<8x128xf32>
    %39 = vector.shape_cast %36 : vector<8x128xf32> to vector<1x8x128xf32>
    tpu.vector_store %arg9[%c0_23, %c0_24, %c0_25], %39 {strides = array<i32>} : memref<1x8x128xf32, #tpu.memory_space<vmem>>, vector<1x8x128xf32>,
    %40 = vector.extract_strided_slice %1 {offsets = [0, 124], sizes = [8, 4], strides = [1, 1]} : vector<8x128xf32> to vector<8x4xf32>
    %c0_26 = arith.constant 0 : index
    %c0_27 = arith.constant 0 : index
    %41 = vector.load %arg10[%c0_26, %c0_27] : memref<8x4xf32, #tpu.memory_space<vmem>>, vector<8x4xf32>
    tpu.vector_store %arg10[%c0_26, %c0_27], %40 {strides = array<i32>} : memref<8x4xf32, #tpu.memory_space<vmem>>, vector<8x4xf32>,
    %42 = vector.extract_strided_slice %17 {offsets = [0, 124], sizes = [8, 4], strides = [1, 1]} : vector<8x128xf32> to vector<8x4xf32>
    %c0_28 = arith.constant 0 : index
    %c0_29 = arith.constant 0 : index
    %43 = vector.load %arg11[%c0_28, %c0_29] : memref<8x4xf32, #tpu.memory_space<vmem>>, vector<8x4xf32>
    tpu.vector_store %arg11[%c0_28, %c0_29], %42 {strides = array<i32>} : memref<8x4xf32, #tpu.memory_space<vmem>>, vector<8x4xf32>,
    return
  }
  func.func @transform_0(%arg0: i32, %arg1: i32) -> (i32, i32, i32) {
    %c0_i32 = arith.constant 0 : i32
    %c0_i32_0 = arith.constant 0 : i32
    return %arg0, %c0_i32, %arg1 : i32, i32, i32
  }
  func.func @transform_1(%arg0: i32, %arg1: i32) -> (i32, i32) {
    %c0_i32 = arith.constant 0 : i32
    %c0_i32_0 = arith.constant 0 : i32
    %c0_i32_1 = arith.constant 0 : i32
    return %c0_i32, %c0_i32_0 : i32, i32
  }
  func.func @transform_2(%arg0: i32, %arg1: i32) -> (i32, i32) {
    %c0_i32 = arith.constant 0 : i32
    %c0_i32_0 = arith.constant 0 : i32
    %c0_i32_1 = arith.constant 0 : i32
    return %c0_i32, %c0_i32_0 : i32, i32
  }
  func.func @transform_3(%arg0: i32, %arg1: i32) -> (i32, i32) {
    %c0_i32 = arith.constant 0 : i32
    %c0_i32_0 = arith.constant 0 : i32
    %c0_i32_1 = arith.constant 0 : i32
    return %c0_i32, %c0_i32_0 : i32, i32
  }
  func.func @transform_4(%arg0: i32, %arg1: i32) -> (i32, i32) {
    %c0_i32 = arith.constant 0 : i32
    %c0_i32_0 = arith.constant 0 : i32
    %c0_i32_1 = arith.constant 0 : i32
    return %c0_i32, %c0_i32_0 : i32, i32
  }
  func.func @transform_5(%arg0: i32, %arg1: i32) -> (i32, i32) {
    %c0_i32 = arith.constant 0 : i32
    %c0_i32_0 = arith.constant 0 : i32
    %c0_i32_1 = arith.constant 0 : i32
    return %c0_i32, %c0_i32_0 : i32, i32
  }
  func.func @transform_6(%arg0: i32, %arg1: i32) -> (i32, i32) {
    %c0_i32 = arith.constant 0 : i32
    %c0_i32_0 = arith.constant 0 : i32
    %c0_i32_1 = arith.constant 0 : i32
    return %c0_i32, %c0_i32_0 : i32, i32
  }
  func.func @transform_7(%arg0: i32, %arg1: i32) -> (i32, i32, i32) {
    %c0_i32 = arith.constant 0 : i32
    %c0_i32_0 = arith.constant 0 : i32
    return %arg0, %c0_i32, %arg1 : i32, i32, i32
  }
}

</mosaic_0001>

<llo_original>
// kernel: tpu_custom_call.1
$region0: #{tpu_custom_call.1}
  #allocation0 [shape = 'u32[]', space=smem, size = 0x4, offset = 0x4, fixed_abs, tag = 'smem constant byte address 0x4 - core index']
  #allocation1 [shape = 'u32[144,128]{1,0:T(1,128)}', space=vmem, size = 0x12000, scoped, tag = 'internal scratch']
  #allocation2 [shape = 'f32[8,4]{1,0:T(8,128)}', space=vmem, size = 0x1000, scoped, tag = 'scratch operand']
  #allocation3 [shape = 'f32[8,4]{1,0:T(8,128)}', space=vmem, size = 0x1000, scoped, tag = 'scratch operand']
  %s0 = inlined_call_operand.hbm [shape: f32[2,8,384], index: 0, kind: input, shape index: {}]
  %s1 = inlined_call_operand.vmem [shape: f32[8,24], index: 1, kind: input, shape index: {}]
  %s2 = inlined_call_operand.vmem [shape: f32[8,1], index: 2, kind: input, shape index: {}]
  %s3 = inlined_call_operand.vmem [shape: f32[8,24], index: 3, kind: input, shape index: {}]
  %s4 = inlined_call_operand.vmem [shape: f32[8,1], index: 4, kind: input, shape index: {}]
  %s5 = inlined_call_operand.vmem [shape: f32[8,8], index: 5, kind: input, shape index: {}]
  %s6 = inlined_call_operand.vmem [shape: f32[8,1], index: 6, kind: input, shape index: {}]
  %s7 = inlined_call_operand.hbm [shape: f32[2,8,384], index: 7, kind: output, shape index: {}]
  %s8 = sld [smem:[#allocation0]]
  $region69: #{tpu_custom_call.1} parent=0
    _
  %s10 = ssub.s32 1, %s8
  %s11 = scalar_select 0, %s10, %s8
  $region1: #{tpu_custom_call.1} parent=0
    #allocation4 [shape = 'u8[8192]{0}', space=vmem, size = 0x2000, scoped, tag = 'input window, operand 0']
    #allocation5 [shape = 's32[2]{0}', space=sflag, size = 0x8, scoped, tag = 'scoped memory for tpu_custom_call.1']
    #allocation6 [shape = 's32[2]{0}', space=sflag, size = 0x8, scoped, tag = 'scoped memory for tpu_custom_call.1']
    #allocation7 [shape = 'u8[8192]{0}', space=vmem, size = 0x2000, scoped, tag = 'output window, operand 0']
    %12 = vsyncpa [#allocation5], 0
    %s13 = scalar_lea.sflag [#allocation5], 1
    %14 = vsyncpa %s13, 0
    %15 = vsyncpa [#allocation6], 0
    %s16 = scalar_lea.sflag [#allocation6], 1
    %17 = vsyncpa %s16, 0
    loop: start=0, step=1, limit=8
    $region2: #{tpu_custom_call.1} parent=1 // loop_pre_header
      _
    $region3: #{tpu_custom_call.1} parent=1 // loop_header
      %s19 = sphi 0, %s23
      %p20 = scmp.ge.s32.totalorder %s19, 8
      %s26 = sphi 0, %s38
      %s27 = sphi 0, %s34
      %s28 = sphi 0, %s26
      %s29 = sphi 0, %s27
      %s30 = sphi 0, %s28
      %s31 = sphi 0, %s29
      %s43 = sphi 0, %s45
      %s46 = sphi 0, %s43
      %s47 = sphi 0, %s46
      %s63 = sphi 0, %s47
      %s67 = sphi 0, %s67
      %s69 = sphi 0, %s67
      %s70 = sphi 0, %s69
      %s84 = sphi 0, %s70
      %s88 = sphi 0, %s88
      %s90 = sphi 0, %s88
      %s91 = sphi 0, %s90
      %s105 = sphi 0, %s91
      %s109 = sphi 0, %s109
      %s111 = sphi 0, %s109
      %s112 = sphi 0, %s111
      %s126 = sphi 0, %s112
      %s130 = sphi 0, %s130
      %s132 = sphi 0, %s130
      %s133 = sphi 0, %s132
      %s147 = sphi 0, %s133
      %s151 = sphi 0, %s151
      %s153 = sphi 0, %s151
      %s154 = sphi 0, %s153
      %s168 = sphi 0, %s154
      %s172 = sphi 0, %s172
      %s174 = sphi 0, %s172
      %s175 = sphi 0, %s174
      %s189 = sphi 0, %s175
      %s197 = sphi 0, %s199
      %s200 = sphi 0, %s197
      %s201 = sphi 0, %s200
      %s217 = sphi 0, %s201
    $region4: #{tpu_custom_call.1} parent=1 // loop_header_branch
      %22 = sbr.rel (%p20) target = $region8
    $region5: #{tpu_custom_call.1} parent=1 // loop_body
      %s24 = ssub.s32 %s19, 1
      %s25 = ssub.s32 %s19, 2
      %s32 = sadd.s32 1, %s27
      %p33 = scmp.ge.s32.totalorder %s32, 3
      %s34 = scalar_select %p33, 0, %s32
      %s35 = sadd.s32 1, %s26
      %s36 = scalar_select %p33, %s35, %s26
      %p37 = scmp.ge.s32.totalorder %s36, 2
      %s38 = scalar_select %p37, 0, %s36
      %s39 = ssub.s32 %s26, %s38
      %s40 = ssub.s32 %s27, %s34
      %s41 = sor.u32 %s39, %s40
      %p42 = scmp.eq.s32.totalorder %s41, 0
      %s44 = sadd.s32 %s43, 1
      %s45 = scalar_select %p42, %s43, %s44
      %p48 = pneg %p42
      %p49 = scmp.eq.s32.totalorder %s19, 5
      %p50 = por %p48, %p49
      %p51 = scmp.ne.s32.totalorder %s43, %s46
      %p52 = scmp.eq.s32.totalorder %s19, 0
      %p53 = por %p51, %p52
      %p54 = scmp.ne.s32.totalorder %s43, %s46
      %p55 = scmp.eq.s32.totalorder %s24, 5
      %p56 = por %p54, %p55
      %p57 = scmp.ne.s32.totalorder %s46, %s47
      %p58 = scmp.eq.s32.totalorder %s24, 0
      %p59 = por %p57, %p58
      %p60 = scmp.ne.s32.totalorder %s46, %s47
      %p61 = scmp.eq.s32.totalorder %s25, 5
      %p62 = por %p60, %p61
      %p64 = scmp.ne.s32.totalorder %s47, %s63
      %p65 = scmp.eq.s32.totalorder %s25, 0
      %p66 = por %p64, %p65
      %s68 = sadd.s32 %s67, 1
      %p71 = scmp.eq.s32.totalorder %s19, 5
      %p72 = scmp.ne.s32.totalorder %s67, %s69
      %p73 = scmp.eq.s32.totalorder %s19, 0
      %p74 = por %p72, %p73
      %p75 = scmp.ne.s32.totalorder %s67, %s69
      %p76 = scmp.eq.s32.totalorder %s24, 5
      %p77 = por %p75, %p76
      %p78 = scmp.ne.s32.totalorder %s69, %s70
      %p79 = scmp.eq.s32.totalorder %s24, 0
      %p80 = por %p78, %p79
      %p81 = scmp.ne.s32.totalorder %s69, %s70
      %p82 = scmp.eq.s32.totalorder %s25, 5
      %p83 = por %p81, %p82
      %p85 = scmp.ne.s32.totalorder %s70, %s84
      %p86 = scmp.eq.s32.totalorder %s25, 0
      %p87 = por %p85, %p86
      %s89 = sadd.s32 %s88, 1
      %p92 = scmp.eq.s32.totalorder %s19, 5
      %p93 = scmp.ne.s32.totalorder %s88, %s90
      %p94 = scmp.eq.s32.totalorder %s19, 0
      %p95 = por %p93, %p94
      %p96 = scmp.ne.s32.totalorder %s88, %s90
      %p97 = scmp.eq.s32.totalorder %s24, 5
      %p98 = por %p96, %p97
      %p99 = scmp.ne.s32.totalorder %s90, %s91
      %p100 = scmp.eq.s32.totalorder %s24, 0
      %p101 = por %p99, %p100
      %p102 = scmp.ne.s32.totalorder %s90, %s91
      %p103 = scmp.eq.s32.totalorder %s25, 5
      %p104 = por %p102, %p103
      %p106 = scmp.ne.s32.totalorder %s91, %s105
      %p107 = scmp.eq.s32.totalorder %s25, 0
      %p108 = por %p106, %p107
      %s110 = sadd.s32 %s109, 1
      %p113 = scmp.eq.s32.totalorder %s19, 5
      %p114 = scmp.ne.s32.totalorder %s109, %s111
      %p115 = scmp.eq.s32.totalorder %s19, 0
      %p116 = por %p114, %p115
      %p117 = scmp.ne.s32.totalorder %s109, %s111
      %p118 = scmp.eq.s32.totalorder %s24, 5
      %p119 = por %p117, %p118
      %p120 = scmp.ne.s32.totalorder %s111, %s112
      %p121 = scmp.eq.s32.totalorder %s24, 0
      %p122 = por %p120, %p121
      %p123 = scmp.ne.s32.totalorder %s111, %s112
      %p124 = scmp.eq.s32.totalorder %s25, 5
      %p125 = por %p123, %p124
      %p127 = scmp.ne.s32.totalorder %s112, %s126
      %p128 = scmp.eq.s32.totalorder %s25, 0
      %p129 = por %p127, %p128
      %s131 = sadd.s32 %s130, 1
      %p134 = scmp.eq.s32.totalorder %s19, 5
      %p135 = scmp.ne.s32.totalorder %s130, %s132
      %p136 = scmp.eq.s32.totalorder %s19, 0
      %p137 = por %p135, %p136
      %p138 = scmp.ne.s32.totalorder %s130, %s132
      %p139 = scmp.eq.s32.totalorder %s24, 5
      %p140 = por %p138, %p139
      %p141 = scmp.ne.s32.totalorder %s132, %s133
      %p142 = scmp.eq.s32.totalorder %s24, 0
      %p143 = por %p141, %p142
      %p144 = scmp.ne.s32.totalorder %s132, %s133
      %p145 = scmp.eq.s32.totalorder %s25, 5
      %p146 = por %p144, %p145
      %p148 = scmp.ne.s32.totalorder %s133, %s147
      %p149 = scmp.eq.s32.totalorder %s25, 0
      %p150 = por %p148, %p149
      %s152 = sadd.s32 %s151, 1
      %p155 = scmp.eq.s32.totalorder %s19, 5
      %p156 = scmp.ne.s32.totalorder %s151, %s153
      %p157 = scmp.eq.s32.totalorder %s19, 0
      %p158 = por %p156, %p157
      %p159 = scmp.ne.s32.totalorder %s151, %s153
      %p160 = scmp.eq.s32.totalorder %s24, 5
      %p161 = por %p159, %p160
      %p162 = scmp.ne.s32.totalorder %s153, %s154
      %p163 = scmp.eq.s32.totalorder %s24, 0
      %p164 = por %p162, %p163
      %p165 = scmp.ne.s32.totalorder %s153, %s154
      %p166 = scmp.eq.s32.totalorder %s25, 5
      %p167 = por %p165, %p166
      %p169 = scmp.ne.s32.totalorder %s154, %s168
      %p170 = scmp.eq.s32.totalorder %s25, 0
      %p171 = por %p169, %p170
      %s173 = sadd.s32 %s172, 1
      %p176 = scmp.eq.s32.totalorder %s19, 5
      %p177 = scmp.ne.s32.totalorder %s172, %s174
      %p178 = scmp.eq.s32.totalorder %s19, 0
      %p179 = por %p177, %p178
      %p180 = scmp.ne.s32.totalorder %s172, %s174
      %p181 = scmp.eq.s32.totalorder %s24, 5
      %p182 = por %p180, %p181
      %p183 = scmp.ne.s32.totalorder %s174, %s175
      %p184 = scmp.eq.s32.totalorder %s24, 0
      %p185 = por %p183, %p184
      %p186 = scmp.ne.s32.totalorder %s174, %s175
      %p187 = scmp.eq.s32.totalorder %s25, 5
      %p188 = por %p186, %p187
      %p190 = scmp.ne.s32.totalorder %s175, %s189
      %p191 = scmp.eq.s32.totalorder %s25, 0
      %p192 = por %p190, %p191
      %s193 = ssub.s32 %s26, %s38
      %s194 = ssub.s32 %s27, %s34
      %s195 = sor.u32 %s193, %s194
      %p196 = scmp.eq.s32.totalorder %s195, 0
      %s198 = sadd.s32 %s197, 1
      %s199 = scalar_select %p196, %s197, %s198
      %p202 = pneg %p196
      %p203 = scmp.eq.s32.totalorder %s19, 5
      %p204 = por %p202, %p203
      %p205 = scmp.ne.s32.totalorder %s197, %s200
      %p206 = scmp.eq.s32.totalorder %s19, 0
      %p207 = por %p205, %p206
      %p208 = scmp.ne.s32.totalorder %s197, %s200
      %p209 = scmp.eq.s32.totalorder %s24, 5
      %p210 = por %p208, %p209
      %p211 = scmp.ne.s32.totalorder %s200, %s201
      %p212 = scmp.eq.s32.totalorder %s24, 0
      %p213 = por %p211, %p212
      %p214 = scmp.ne.s32.totalorder %s200, %s201
      %p215 = scmp.eq.s32.totalorder %s25, 5
      %p216 = por %p214, %p215
      %p218 = scmp.ne.s32.totalorder %s201, %s217
      %p219 = scmp.eq.s32.totalorder %s25, 0
      %p220 = por %p218, %p219
      %p221 = scmp.le.s32.totalorder 1, %s19
      %p222 = scmp.lt.s32.totalorder %s19, 7
      %p223 = pnand %p221, %p222
      %p224 = pneg %p223
      // Predicated region
      $region9: #{tpu_custom_call.1} parent=5 // pred_check
        _
      $region10: #{tpu_custom_call.1} parent=5 // pred_check_branch
        %226 = sbr.rel (%p223) target = $region12
      $region11: #{tpu_custom_call.1} parent=5 // pred_region
        %s227 = ssub.s32 %s19, 1
        // Predicated region
        $region13: #{tpu_custom_call.1} parent=11 // pred_check
          %p228 = pneg %p80
        $region14: #{tpu_custom_call.1} parent=11 // pred_check_branch
          %230 = sbr.rel (%p228) target = $region16
        $region15: #{tpu_custom_call.1} parent=11 // pred_region
          _
        $region16: #{tpu_custom_call.1} parent=11 // pred_fallthru
          _
        // Predicated region
        $region17: #{tpu_custom_call.1} parent=11 // pred_check
          %p231 = pneg %p101
        $region18: #{tpu_custom_call.1} parent=11 // pred_check_branch
          %233 = sbr.rel (%p231) target = $region20
        $region19: #{tpu_custom_call.1} parent=11 // pred_region
          _
        $region20: #{tpu_custom_call.1} parent=11 // pred_fallthru
          _
        // Predicated region
        $region21: #{tpu_custom_call.1} parent=11 // pred_check
          %p234 = pneg %p122
        $region22: #{tpu_custom_call.1} parent=11 // pred_check_branch
          %236 = sbr.rel (%p234) target = $region24
        $region23: #{tpu_custom_call.1} parent=11 // pred_region
          _
        $region24: #{tpu_custom_call.1} parent=11 // pred_fallthru
          _
        // Predicated region
        $region25: #{tpu_custom_call.1} parent=11 // pred_check
          %p237 = pneg %p143
        $region26: #{tpu_custom_call.1} parent=11 // pred_check_branch
          %239 = sbr.rel (%p237) target = $region28
        $region27: #{tpu_custom_call.1} parent=11 // pred_region
          _
        $region28: #{tpu_custom_call.1} parent=11 // pred_fallthru
          _
        // Predicated region
        $region29: #{tpu_custom_call.1} parent=11 // pred_check
          %p240 = pneg %p164
        $region30: #{tpu_custom_call.1} parent=11 // pred_check_branch
          %242 = sbr.rel (%p240) target = $region32
        $region31: #{tpu_custom_call.1} parent=11 // pred_region
          _
        $region32: #{tpu_custom_call.1} parent=11 // pred_fallthru
          _
        // Predicated region
        $region33: #{tpu_custom_call.1} parent=11 // pred_check
          %p243 = pneg %p185
        $region34: #{tpu_custom_call.1} parent=11 // pred_check_branch
          %245 = sbr.rel (%p243) target = $region36
        $region35: #{tpu_custom_call.1} parent=11 // pred_region
          _
        $region36: #{tpu_custom_call.1} parent=11 // pred_fallthru
          _
      $region12: #{tpu_custom_call.1} parent=5 // pred_fallthru
        _
      %p246 = scmp.lt.s32.totalorder %s19, 6
      // Predicated region
      $region37: #{tpu_custom_call.1} parent=5 // pred_check
        %p247 = pneg %p246
      $region38: #{tpu_custom_call.1} parent=5 // pred_check_branch
        %249 = sbr.rel (%p247) target = $region40
      $region39: #{tpu_custom_call.1} parent=5 // pred_region
        // Predicated region
        $region41: #{tpu_custom_call.1} parent=39 // pred_check
          %p250 = pneg %p53
        $region42: #{tpu_custom_call.1} parent=39 // pred_check_branch
          %252 = sbr.rel (%p250) target = $region44
        $region43: #{tpu_custom_call.1} parent=39 // pred_region
          %s253 = sand.u32 %s43, 1
          %s254 = scalar_lea.sflag [#allocation5], %s253
          %s255 = sand.u32 %s43, 1
          %s256 = smul.addr %s255, 8
          %s257 = scalar_lea.vmem [#allocation4], %s256
          %s259 = ssub.s32 128, 128
          %260 = vsyncadd %s254, %s259
          %s261 = smul.addr %s26, 3
          %s262 = sadd.s32 %s27, %s261
          %s263 = smul.addr %s262, 128
          %s264 = scalar_lea.hbm %s0, %s263
          %s266 = sshll.u32 %s257, 4
          %s267 = int_to_ptr.vmem [resolvable:$true] %s266
          %269 = dma.hbm_to_vmem [thread:$0]  %s264, 128, %s267, %s254
        $region44: #{tpu_custom_call.1} parent=39 // pred_fallthru
          _
      $region40: #{tpu_custom_call.1} parent=5 // pred_fallthru
        _
      %p270 = scmp.le.s32.totalorder 1, %s19
      %p271 = scmp.lt.s32.totalorder %s19, 7
      %p272 = pnand %p270, %p271
      %p273 = pneg %p272
      // Predicated region
      $region45: #{tpu_custom_call.1} parent=5 // pred_check
        _
      $region46: #{tpu_custom_call.1} parent=5 // pred_check_branch
        %275 = sbr.rel (%p272) target = $region48
      $region47: #{tpu_custom_call.1} parent=5 // pred_region
        %s276 = ssub.s32 %s19, 1
        %s277 = sand.u32 %s46, 1
        %s278 = scalar_lea.sflag [#allocation5], %s277
        %s279 = sand.u32 %s46, 1
        %s280 = smul.addr %s279, 8
        %s281 = scalar_lea.vmem [#allocation4], %s280
        // Predicated region
        $region49: #{tpu_custom_call.1} parent=47 // pred_check
          %p282 = pneg %p59
        $region50: #{tpu_custom_call.1} parent=47 // pred_check_branch
          %284 = sbr.rel (%p282) target = $region52
        $region51: #{tpu_custom_call.1} parent=47 // pred_region
          %285 = dma.done %s278, 128
        $region52: #{tpu_custom_call.1} parent=47 // pred_fallthru
          _
        %s286 = sand.u32 %s46, 1
        %s287 = scalar_lea.sflag [#allocation5], %s286
        %s288 = sand.u32 %s46, 1
        %s289 = smul.addr %s288, 8
        %s290 = scalar_lea.vmem [#allocation4], %s289
        %p291 = pneg %p59
        %p292 = pneg %p56
        %p293 = pneg %p80
        %p294 = pneg %p77
        %p295 = pneg %p101
        %p296 = pneg %p98
        %p297 = pneg %p122
        %p298 = pneg %p119
        %p299 = pneg %p143
        %p300 = pneg %p140
        %p301 = pneg %p164
        %p302 = pneg %p161
        %p303 = pneg %p185
        %p304 = pneg %p182
        %p305 = pneg %p213
        %p306 = pneg %p210
        %s307 = sand.u32 %s200, 1
        %s308 = scalar_lea.sflag [#allocation6], %s307
        %s309 = sand.u32 %s200, 1
        %s310 = smul.addr %s309, 8
        %s311 = scalar_lea.vmem [#allocation7], %s310
        %v312 = vld [vmem:[%s281] sm:$0xff]
        %p313 = scmp.eq.s32.totalorder %s29, 0
        // Predicated region
        $region53: #{tpu_custom_call.1} parent=47 // pred_check
          %p314 = pneg %p313
        $region54: #{tpu_custom_call.1} parent=47 // pred_check_branch
          %316 = sbr.rel (%p314) target = $region56
        $region55: #{tpu_custom_call.1} parent=47 // pred_region
          %vm317 = vcmask 31744
          %318 = vst.msk [vmem:[#allocation2] sm:$0xff] %vm317, 0.0
          %319 = vst.msk [vmem:[#allocation3] sm:$0xff] %vm317, 0.0
        $region56: #{tpu_custom_call.1} parent=47 // pred_fallthru
          _
        %v320 = vld [vmem:[#allocation2] sm:$0xff]
        %322 = vrot.lane.b32.xlu0 %v312, 4
        %v323 = vpop.permute.xlu0 %322
        %vm325 = vcmask 31744
        %v326 = vsel %vm325, %v320, %v323
        %328 = vrot.lane.b32.xlu0 %v326, 126
        %v329 = vpop.permute.xlu0 %328
        %330 = vrot.lane.b32.xlu0 %v323, 126
        %v331 = vpop.permute.xlu0 %330
        %vm332 = vcmask 1031168
        %v333 = vsel %vm332, %v329, %v331
        %335 = vrot.lane.b32.xlu0 %v326, 124
        %v336 = vpop.permute.xlu0 %335
        %337 = vrot.lane.b32.xlu0 %v323, 124
        %v338 = vpop.permute.xlu0 %337
        %vm339 = vcmask 1014784
        %v340 = vsel %vm339, %v336, %v338
        %v342 = vld [vmem:[%s1] sm:$0xff]
        %v343 = vld [vmem:[%s2] sm:$0xff]
        %345 = vset.pattern.permute.xlu0 0
        %346 = vperm.xlu0 %345, %v343
        %v347 = vpop.permute.xlu0 %346
        %vm349 = vcmask 195584
        %v351 = vsel %vm349, %v342, 0
        %353 = vmatprep.subr.mxu0 0.0
        %354 = vmatpush1.msra.mxu0 %v326
        %355 = vmatprep.subr.mxu0 0.0
        %356 = vmatpush1.msra.mxu0 %v333
        %357 = vmatprep.subr.mxu0 0.0
        %358 = vmatpush1.msra.mxu0 %v340
        %359 = vmatprep.subr.mxu0 0.0
        %360 = vmatpush1.msra.mxu0 0.0
        %361 = vmatprep.subr.mxu0 0.0
        %362 = vmatpush1.msra.mxu0 0.0
        %363 = vmatprep.subr.mxu0 0.0
        %364 = vmatpush1.msra.mxu0 0.0
        %365 = vmatprep.subr.mxu0 0.0
        %366 = vmatpush1.msra.mxu0 0.0
        %367 = vmatprep.subr.mxu0 0.0
        %368 = vmatpush1.msra.mxu0 0.0
        %369 = vmatprep.subr.mxu0 0.0
        %370 = vmatpush1.msra.mxu0 0.0
        %371 = vmatprep.subr.mxu0 0.0
        %372 = vmatpush1.msra.mxu0 0.0
        %373 = vmatprep.subr.mxu0 0.0
        %374 = vmatpush1.msra.mxu0 0.0
        %375 = vmatprep.subr.mxu0 0.0
        %376 = vmatpush1.msra.mxu0 0.0
        %377 = vmatprep.subr.mxu0 0.0
        %378 = vmatpush1.msra.mxu0 0.0
        %379 = vmatprep.subr.mxu0 0.0
        %380 = vmatpush1.msra.mxu0 0.0
        %381 = vmatprep.subr.mxu0 0.0
        %382 = vmatpush1.msra.mxu0 0.0
        %383 = vmatprep.subr.mxu0 0.0
        %384 = vmatpush1.msra.mxu0 0.0
        %385 = vmatprep.subr.mxu0 0.0
        %386 = vmatpush1.msra.mxu0 0.0
        %387 = vmatprep.subr.mxu0 0.0
        %388 = vmatpush1.msra.mxu0 0.0
        %389 = vmatprep.subr.mxu0 0.0
        %390 = vmatpush1.msra.mxu0 0.0
        %391 = vmatprep.subr.mxu0 0.0
        %392 = vmatpush1.msra.mxu0 0.0
        %393 = vmatprep.subr.mxu0 0.0
        %394 = vmatpush1.msra.mxu0 0.0
        %395 = vmatprep.subr.mxu0 0.0
        %396 = vmatpush1.msra.mxu0 0.0
        %397 = vmatprep.subr.mxu0 0.0
        %398 = vmatpush1.msra.mxu0 0.0
        %399 = vmatprep.subr.mxu0 0.0
        %400 = vmatpush1.msra.mxu0 0.0
        %401 = vmatprep.subr.mxu0 0.0
        %402 = vmatpush1.msra.mxu0 0.0
        %403 = vmatprep.subr.mxu0 0.0
        %404 = vmatpush1.msra.mxu0 0.0
        %405 = vmatprep.subr.mxu0 0.0
        %406 = vmatpush1.msra.mxu0 0.0
        %407 = vmatprep.subr.mxu0 0.0
        %408 = vmatpush1.msra.mxu0 0.0
        %409 = vmatprep.subr.mxu0 0.0
        %410 = vmatpush1.msra.mxu0 0.0
        %411 = vmatprep.subr.mxu0 0.0
        %412 = vmatpush1.msra.mxu0 0.0
        %413 = vmatprep.subr.mxu0 0.0
        %414 = vmatpush1.msra.mxu0 0.0
        %415 = vmatprep.subr.mxu0 0.0
        %416 = vmatpush1.msra.mxu0 0.0
        %417 = vmatprep.mubr.f32.mxu0 0.0
        %418 = vmatmul.mubr.f32.gmra.mrb[0].mxu0 %v351
        %v419 = vpop.f32.mrb[0].mxu0
        %v420 = vadd.f32 %v347, %v419
        %v421 = vpop.f32.mrb[0].mxu0
        %422 = vdwg.mxu0
        %v423 = vmax.f32 %v420, 0.0
        %v424 = vld [vmem:[#allocation3] sm:$0xff]
        %426 = vrot.lane.b32.xlu0 %v423, 4
        %v427 = vpop.permute.xlu0 %426
        %v429 = vsel %vm325, %v424, %v427
        %431 = vrot.lane.b32.xlu0 %v429, 126
        %v432 = vpop.permute.xlu0 %431
        %433 = vrot.lane.b32.xlu0 %v427, 126
        %v434 = vpop.permute.xlu0 %433
        %v435 = vsel %vm332, %v432, %v434
        %437 = vrot.lane.b32.xlu0 %v429, 124
        %v438 = vpop.permute.xlu0 %437
        %439 = vrot.lane.b32.xlu0 %v427, 124
        %v440 = vpop.permute.xlu0 %439
        %v441 = vsel %vm339, %v438, %v440
        %v443 = vld [vmem:[%s3] sm:$0xff]
        %v444 = vld [vmem:[%s4] sm:$0xff]
        %446 = vset.pattern.permute.xlu0 0
        %447 = vperm.xlu0 %446, %v444
        %v448 = vpop.permute.xlu0 %447
        %v451 = vsel %vm349, %v443, 0
        %453 = vmatprep.subr.mxu0 0.0
        %454 = vmatpush1.msra.mxu0 %v429
        %455 = vmatprep.subr.mxu0 0.0
        %456 = vmatpush1.msra.mxu0 %v435
        %457 = vmatprep.subr.mxu0 0.0
        %458 = vmatpush1.msra.mxu0 %v441
        %459 = vmatprep.subr.mxu0 0.0
        %460 = vmatpush1.msra.mxu0 0.0
        %461 = vmatprep.subr.mxu0 0.0
        %462 = vmatpush1.msra.mxu0 0.0
        %463 = vmatprep.subr.mxu0 0.0
        %464 = vmatpush1.msra.mxu0 0.0
        %465 = vmatprep.subr.mxu0 0.0
        %466 = vmatpush1.msra.mxu0 0.0
        %467 = vmatprep.subr.mxu0 0.0
        %468 = vmatpush1.msra.mxu0 0.0
        %469 = vmatprep.subr.mxu0 0.0
        %470 = vmatpush1.msra.mxu0 0.0
        %471 = vmatprep.subr.mxu0 0.0
        %472 = vmatpush1.msra.mxu0 0.0
        %473 = vmatprep.subr.mxu0 0.0
        %474 = vmatpush1.msra.mxu0 0.0
        %475 = vmatprep.subr.mxu0 0.0
        %476 = vmatpush1.msra.mxu0 0.0
        %477 = vmatprep.subr.mxu0 0.0
        %478 = vmatpush1.msra.mxu0 0.0
        %479 = vmatprep.subr.mxu0 0.0
        %480 = vmatpush1.msra.mxu0 0.0
        %481 = vmatprep.subr.mxu0 0.0
        %482 = vmatpush1.msra.mxu0 0.0
        %483 = vmatprep.subr.mxu0 0.0
        %484 = vmatpush1.msra.mxu0 0.0
        %485 = vmatprep.subr.mxu0 0.0
        %486 = vmatpush1.msra.mxu0 0.0
        %487 = vmatprep.subr.mxu0 0.0
        %488 = vmatpush1.msra.mxu0 0.0
        %489 = vmatprep.subr.mxu0 0.0
        %490 = vmatpush1.msra.mxu0 0.0
        %491 = vmatprep.subr.mxu0 0.0
        %492 = vmatpush1.msra.mxu0 0.0
        %493 = vmatprep.subr.mxu0 0.0
        %494 = vmatpush1.msra.mxu0 0.0
        %495 = vmatprep.subr.mxu0 0.0
        %496 = vmatpush1.msra.mxu0 0.0
        %497 = vmatprep.subr.mxu0 0.0
        %498 = vmatpush1.msra.mxu0 0.0
        %499 = vmatprep.subr.mxu0 0.0
        %500 = vmatpush1.msra.mxu0 0.0
        %501 = vmatprep.subr.mxu0 0.0
        %502 = vmatpush1.msra.mxu0 0.0
        %503 = vmatprep.subr.mxu0 0.0
        %504 = vmatpush1.msra.mxu0 0.0
        %505 = vmatprep.subr.mxu0 0.0
        %506 = vmatpush1.msra.mxu0 0.0
        %507 = vmatprep.subr.mxu0 0.0
        %508 = vmatpush1.msra.mxu0 0.0
        %509 = vmatprep.subr.mxu0 0.0
        %510 = vmatpush1.msra.mxu0 0.0
        %511 = vmatprep.subr.mxu0 0.0
        %512 = vmatpush1.msra.mxu0 0.0
        %513 = vmatprep.subr.mxu0 0.0
        %514 = vmatpush1.msra.mxu0 0.0
        %515 = vmatprep.subr.mxu0 0.0
        %516 = vmatpush1.msra.mxu0 0.0
        %517 = vmatprep.mubr.f32.mxu0 0.0
        %518 = vmatmul.mubr.f32.gmra.mrb[0].mxu0 %v451
        %v519 = vpop.f32.mrb[0].mxu0
        %v520 = vadd.f32 %v448, %v519
        %v521 = vpop.f32.mrb[0].mxu0
        %522 = vdwg.mxu0
        %v523 = vmax.f32 %v520, 0.0
        %v524 = vld [vmem:[%s5] sm:$0xff]
        %v525 = vld [vmem:[%s6] sm:$0xff]
        %527 = vset.pattern.permute.xlu0 0
        %528 = vperm.xlu0 %527, %v525
        %v529 = vpop.permute.xlu0 %528
        %vm531 = vcmask 64512
        %v533 = vsel %vm531, %v524, 0
        %535 = vmatprep.subr.mxu0 0.0
        %536 = vmatpush1.msra.mxu0 %v312
        %537 = vmatprep.subr.mxu0 0.0
        %538 = vmatpush1.msra.mxu0 0.0
        %539 = vmatprep.subr.mxu0 0.0
        %540 = vmatpush1.msra.mxu0 0.0
        %541 = vmatprep.subr.mxu0 0.0
        %542 = vmatpush1.msra.mxu0 0.0
        %543 = vmatprep.subr.mxu0 0.0
        %544 = vmatpush1.msra.mxu0 0.0
        %545 = vmatprep.subr.mxu0 0.0
        %546 = vmatpush1.msra.mxu0 0.0
        %547 = vmatprep.subr.mxu0 0.0
        %548 = vmatpush1.msra.mxu0 0.0
        %549 = vmatprep.subr.mxu0 0.0
        %550 = vmatpush1.msra.mxu0 0.0
        %551 = vmatprep.subr.mxu0 0.0
        %552 = vmatpush1.msra.mxu0 0.0
        %553 = vmatprep.subr.mxu0 0.0
        %554 = vmatpush1.msra.mxu0 0.0
        %555 = vmatprep.subr.mxu0 0.0
        %556 = vmatpush1.msra.mxu0 0.0
        %557 = vmatprep.subr.mxu0 0.0
        %558 = vmatpush1.msra.mxu0 0.0
        %559 = vmatprep.subr.mxu0 0.0
        %560 = vmatpush1.msra.mxu0 0.0
        %561 = vmatprep.subr.mxu0 0.0
        %562 = vmatpush1.msra.mxu0 0.0
        %563 = vmatprep.subr.mxu0 0.0
        %564 = vmatpush1.msra.mxu0 0.0
        %565 = vmatprep.subr.mxu0 0.0
        %566 = vmatpush1.msra.mxu0 0.0
        %567 = vmatprep.subr.mxu0 0.0
        %568 = vmatpush1.msra.mxu0 0.0
        %569 = vmatprep.subr.mxu0 0.0
        %570 = vmatpush1.msra.mxu0 0.0
        %571 = vmatprep.subr.mxu0 0.0
        %572 = vmatpush1.msra.mxu0 0.0
        %573 = vmatprep.subr.mxu0 0.0
        %574 = vmatpush1.msra.mxu0 0.0
        %575 = vmatprep.subr.mxu0 0.0
        %576 = vmatpush1.msra.mxu0 0.0
        %577 = vmatprep.subr.mxu0 0.0
        %578 = vmatpush1.msra.mxu0 0.0
        %579 = vmatprep.subr.mxu0 0.0
        %580 = vmatpush1.msra.mxu0 0.0
        %581 = vmatprep.subr.mxu0 0.0
        %582 = vmatpush1.msra.mxu0 0.0
        %583 = vmatprep.subr.mxu0 0.0
        %584 = vmatpush1.msra.mxu0 0.0
        %585 = vmatprep.subr.mxu0 0.0
        %586 = vmatpush1.msra.mxu0 0.0
        %587 = vmatprep.subr.mxu0 0.0
        %588 = vmatpush1.msra.mxu0 0.0
        %589 = vmatprep.subr.mxu0 0.0
        %590 = vmatpush1.msra.mxu0 0.0
        %591 = vmatprep.subr.mxu0 0.0
        %592 = vmatpush1.msra.mxu0 0.0
        %593 = vmatprep.subr.mxu0 0.0
        %594 = vmatpush1.msra.mxu0 0.0
        %595 = vmatprep.subr.mxu0 0.0
        %596 = vmatpush1.msra.mxu0 0.0
        %597 = vmatprep.subr.mxu0 0.0
        %598 = vmatpush1.msra.mxu0 0.0
        %599 = vmatprep.mubr.f32.mxu0 0.0
        %600 = vmatmul.mubr.f32.gmra.mrb[0].mxu0 %v533
        %v601 = vpop.f32.mrb[0].mxu0
        %v602 = vadd.f32 %v529, %v601
        %v603 = vpop.f32.mrb[0].mxu0
        %604 = vdwg.mxu0
        %v605 = vadd.f32 %v523, %v602
        %606 = vst [vmem:[%s311] sm:$0xff] %v605
        %607 = vst.msk [vmem:[#allocation2] sm:$0xff] %vm325, %v323
        %608 = vst.msk [vmem:[#allocation3] sm:$0xff] %vm325, %v427
        %s609 = sand.u32 %s200, 1
        %s610 = scalar_lea.sflag [#allocation6], %s609
        %s611 = sand.u32 %s200, 1
        %s612 = smul.addr %s611, 8
        %s613 = scalar_lea.vmem [#allocation7], %s612
        // Predicated region
        $region57: #{tpu_custom_call.1} parent=47 // pred_check
          %p614 = pneg %p210
        $region58: #{tpu_custom_call.1} parent=47 // pred_check_branch
          %616 = sbr.rel (%p614) target = $region60
        $region59: #{tpu_custom_call.1} parent=47 // pred_region
          %s618 = ssub.s32 128, 128
          %619 = vsyncadd %s610, %s618
          %s620 = smul.addr %s28, 3
          %s621 = sadd.s32 %s29, %s620
          %s622 = smul.addr %s621, 128
          %s623 = scalar_lea.hbm %s7, %s622
          %s625 = sshll.u32 %s613, 4
          %s626 = int_to_ptr.vmem [resolvable:$true] %s625
          %628 = dma.vmem_to_hbm [thread:$0]  %s626, 128, %s623, %s610
        $region60: #{tpu_custom_call.1} parent=47 // pred_fallthru
          _
      $region48: #{tpu_custom_call.1} parent=5 // pred_fallthru
        _
      %p629 = scmp.le.s32.totalorder 2, %s19
      // Predicated region
      $region61: #{tpu_custom_call.1} parent=5 // pred_check
        %p630 = pneg %p629
      $region62: #{tpu_custom_call.1} parent=5 // pred_check_branch
        %632 = sbr.rel (%p630) target = $region64
      $region63: #{tpu_custom_call.1} parent=5 // pred_region
        %s633 = ssub.s32 %s19, 2
        // Predicated region
        $region65: #{tpu_custom_call.1} parent=63 // pred_check
          %p634 = pneg %p216
        $region66: #{tpu_custom_call.1} parent=63 // pred_check_branch
          %636 = sbr.rel (%p634) target = $region68
        $region67: #{tpu_custom_call.1} parent=63 // pred_region
          %s637 = sand.u32 %s201, 1
          %s638 = scalar_lea.sflag [#allocation6], %s637
          %s639 = sand.u32 %s201, 1
          %s640 = smul.addr %s639, 8
          %s641 = scalar_lea.vmem [#allocation7], %s640
          %642 = dma.done %s638, 128
        $region68: #{tpu_custom_call.1} parent=63 // pred_fallthru
          _
      $region64: #{tpu_custom_call.1} parent=5 // pred_fallthru
        _
    $region6: #{tpu_custom_call.1} parent=1 // loop_footer
      %s23 = sadd.s32 1, %s19
    $region7: #{tpu_custom_call.1} parent=1 // loop_footer_branch
      %18 = sbr.rel target = $region3
    $region8: #{tpu_custom_call.1} parent=1 // loop_exit
      _
    %643 = vsyncpa [#allocation5], 1
    %s644 = scalar_lea.sflag [#allocation5], 1
    %645 = vsyncpa %s644, 1
    %646 = vsyncpa [#allocation6], 1
    %s647 = scalar_lea.sflag [#allocation6], 1
    %648 = vsyncpa %s647, 1

</llo_original>
